<compile_context>
chip_gen: v6e
topology: v6e:2x2x1
jax: 0.10.0
libtpu: 0.0.40
codegen_flags: <defaults>
</compile_context>

<pallas_src>
import functools

import jax
import jax.numpy as jnp
from jax import lax
from jax.experimental import pallas as pl
from jax.experimental.pallas import tpu as pltpu


def _round_up(x, m):
    return ((x + m - 1) // m) * m


# ---------------------------------------------------------------------------
# Kernel 1: hoisted linear projection  y = x @ W.T + b   (nn.Linear semantics)
# ---------------------------------------------------------------------------
def _linear_kernel(x_ref, w_ref, b_ref, o_ref):
    # x: (tr, Ep), w: (Lp, Ep), b: (1, Lp) -> o: (tr, Lp)
    # Contract the shared E axis directly on the MXU (no materialized W.T).
    y = lax.dot_general(
        x_ref[...], w_ref[...],
        dimension_numbers=(((1,), (1,)), ((), ())),
        preferred_element_type=jnp.float32,
    )
    o_ref[...] = (y + b_ref[...]).astype(o_ref.dtype)


def _project(x, weight, bias, *, row_tile):
    Rp, Ep = x.shape
    Lp = weight.shape[0]
    return pl.pallas_call(
        _linear_kernel,
        out_shape=jax.ShapeDtypeStruct((Rp, Lp), jnp.float32),
        grid=(Rp // row_tile,),
        in_specs=[
            pl.BlockSpec((row_tile, Ep), lambda i: (i, 0)),
            pl.BlockSpec((Lp, Ep), lambda i: (0, 0)),   # weight resident
            pl.BlockSpec((1, Lp), lambda i: (0, 0)),    # bias resident
        ],
        out_specs=pl.BlockSpec((row_tile, Lp), lambda i: (i, 0)),
        compiler_params=pltpu.CompilerParams(
            dimension_semantics=("parallel",)),
        cost_estimate=pl.CostEstimate(
            flops=2 * Rp * Ep * Lp,
            transcendentals=0,
            bytes_accessed=4 * (Rp * Ep + Lp * Ep + Lp + Rp * Lp),
        ),
    )(x, weight, bias)


# ---------------------------------------------------------------------------
# Kernel 2: streamed attention  (grid = (N tiles, M tiles); M is a reduction)
# ---------------------------------------------------------------------------
def _attn_kernel(p_lat_ref, s_lat_ref, sec_ref, o_ref, ctx_ref, ss_ref):
    k = pl.program_id(1)

    @pl.when(k == 0)
    def _():
        ctx_ref[...] = jnp.zeros_like(ctx_ref)
        ss_ref[...] = jnp.zeros_like(ss_ref)

    # score tile (tm, tk): contract the latent dim directly (no s_lat.T copy).
    scores = lax.dot_general(
        p_lat_ref[...], s_lat_ref[...],
        dimension_numbers=(((1,), (1,)), ((), ())),
        preferred_element_type=jnp.float32,
    )
    scores = jnp.maximum(scores, 0.0)                      # ReLU

    # Online accumulation across the M axis.
    ss_ref[...] += jnp.sum(scores * scores, axis=1, keepdims=True)
    ctx_ref[...] += jnp.dot(scores, sec_ref[...],
                            preferred_element_type=jnp.float32)

    @pl.when(k == pl.num_programs(1) - 1)
    def _():
        # F.normalize(p=2, dim=1): divide rows by max(||row||, 1e-12)
        #   == scale the context accumulator by rsqrt(max(sumsq, 1e-24)).
        inv = lax.rsqrt(jnp.maximum(ss_ref[...], 1e-24))
        o_ref[...] = (ctx_ref[...] * inv).astype(o_ref.dtype)


@jax.jit
def attention_forward(primary, secondary, weight, bias):
    N, E = primary.shape
    M = secondary.shape[0]
    L = weight.shape[0]

    # Lane-dense padding: feature dims -> x128, row tiles -> x8 (f32 sublane).
    Ep = _round_up(E, 128)
    Lp = _round_up(L, 128)
    tm = min(256, _round_up(N, 8))     # query-row tile
    tk = min(512, _round_up(M, 8))     # streamed secondary-row tile
    Np = _round_up(N, tm)
    Mp = _round_up(M, tk)

    f32 = jnp.float32
    p = jnp.pad(primary.astype(f32), ((0, Np - N), (0, Ep - E)))
    s = jnp.pad(secondary.astype(f32), ((0, Mp - M), (0, Ep - E)))
    w = jnp.pad(weight.astype(f32), ((0, Lp - L), (0, Ep - E)))
    b = jnp.pad(bias.astype(f32), ((0, 0), (0, Lp - L)))

    # Hoisted projections: each computed exactly once.
    p_lat = _project(p, w, b, row_tile=tm)
    s_lat = _project(s, w, b, row_tile=tk)

    # Padded secondary rows pick up the bias through the projection; zero them
    # so they contribute nothing to scores / norm / context.
    if Mp > M:
        valid = (jnp.arange(Mp) < M)[:, None]
        s_lat = jnp.where(valid, s_lat, 0.0)

    out = pl.pallas_call(
        _attn_kernel,
        out_shape=jax.ShapeDtypeStruct((Np, Ep), f32),
        grid=(Np // tm, Mp // tk),
        in_specs=[
            pl.BlockSpec((tm, Lp), lambda i, k: (i, 0)),   # p_lat tile
            pl.BlockSpec((tk, Lp), lambda i, k: (k, 0)),   # s_lat tile
            pl.BlockSpec((tk, Ep), lambda i, k: (k, 0)),   # secondary tile
        ],
        out_specs=pl.BlockSpec((tm, Ep), lambda i, k: (i, 0)),
        scratch_shapes=[
            pltpu.VMEM((tm, Ep), f32),   # context accumulator
            pltpu.VMEM((tm, 1), f32),    # per-row sum of squares
        ],
        compiler_params=pltpu.CompilerParams(
            dimension_semantics=("parallel", "arbitrary")),
        cost_estimate=pl.CostEstimate(
            flops=2 * (Np * Mp * Lp + Np * Mp * Ep),
            transcendentals=Np,
            bytes_accessed=4 * (Np * Lp + Mp * Lp + Mp * Ep + Np * Ep),
        ),
    )(p_lat, s_lat, s)

    return out[:N, :E]


def reference_forward(primary, secondary, weight, bias):
    p_lat = primary @ weight.T + bias
    s_lat = secondary @ weight.T + bias
    scores = jnp.maximum(p_lat @ s_lat.T, 0.0)
    norm = jnp.maximum(jnp.linalg.norm(scores, axis=1, keepdims=True), 1e-12)
    scores = scores / norm
    return scores @ secondary


if __name__ == "__main__":
    embed_dim, latent_dim = 32, 16
    N, M = 8, 16

    key = jax.random.PRNGKey(0)
    k1, k2, k3, k4 = jax.random.split(key, 4)

    primary = jax.random.normal(k1, (N, embed_dim), dtype=jnp.float32)
    secondary = jax.random.normal(k2, (M, embed_dim), dtype=jnp.float32)

    # Deterministic nn.Linear-style init: U(-1/sqrt(fan_in), 1/sqrt(fan_in))
    bound = 1.0 / (embed_dim ** 0.5)
    weight = jax.random.uniform(
        k3, (latent_dim, embed_dim), jnp.float32, minval=-bound, maxval=bound
    )
    bias = jax.random.uniform(
        k4, (1, latent_dim), jnp.float32, minval=-bound, maxval=bound
    )

    out = attention_forward(primary, secondary, weight, bias)
    out = jax.block_until_ready(out)

    ref = reference_forward(primary, secondary, weight, bias)
    assert out.shape == (N, embed_dim)
    assert jnp.allclose(out, ref, atol=1e-4, rtol=1e-4), float(
        jnp.max(jnp.abs(out - ref))
    )

    print("KERNEL_OK")
</pallas_src>

<mosaic_0001>
module attributes {stable_mosaic.version = 11 : i64} {
  func.func @_linear_kernel(%arg0: i32, %arg1: memref<8x128xf32, #tpu.memory_space<vmem>>, %arg2: memref<128x128xf32, #tpu.memory_space<vmem>>, %arg3: memref<1x128xf32, #tpu.memory_space<vmem>>, %arg4: memref<8x128xf32, #tpu.memory_space<vmem>>) attributes {dimension_semantics = [#tpu.dimension_semantics<parallel>], iteration_bounds = array<i64: 1>, scalar_prefetch = 0 : i64, scratch_operands = 0 : i64, tpu.core_type = #tpu.core_type<tc>, window_params = [{transform_indices = @transform_0, window_bounds = array<i64: 8, 128>}, {pipeline_mode = #tpu.pipeline_mode<synchronous>, transform_indices = @transform_1, window_bounds = array<i64: 128, 128>}, {pipeline_mode = #tpu.pipeline_mode<synchronous>, transform_indices = @transform_2, window_bounds = array<i64: 1, 128>}, {transform_indices = @transform_3, window_bounds = array<i64: 8, 128>}]} {
    %c0 = arith.constant 0 : index
    %c0_0 = arith.constant 0 : index
    %0 = vector.load %arg1[%c0, %c0_0] : memref<8x128xf32, #tpu.memory_space<vmem>>, vector<8x128xf32>
    %c0_1 = arith.constant 0 : index
    %c0_2 = arith.constant 0 : index
    %1 = vector.load %arg2[%c0_1, %c0_2] : memref<128x128xf32, #tpu.memory_space<vmem>>, vector<128x128xf32>
    %cst = arith.constant dense<0.000000e+00> : vector<8x128xf32>
    %2 = tpu.matmul %0, %1, %cst {dimension_numbers = #tpu.dot_dimension_numbers<[1], [1], [0], [0], [0, 0, 1, 0], [], []>} : vector<8x128xf32>, vector<128x128xf32>, vector<8x128xf32> -> vector<8x128xf32>
    %c0_3 = arith.constant 0 : index
    %c0_4 = arith.constant 0 : index
    %3 = vector.load %arg3[%c0_3, %c0_4] : memref<1x128xf32, #tpu.memory_space<vmem>>, vector<1x128xf32>
    %4 = vector.broadcast %3 : vector<1x128xf32> to vector<8x128xf32>
    %5 = arith.addf %2, %4 : vector<8x128xf32>
    %c0_5 = arith.constant 0 : index
    %c0_6 = arith.constant 0 : index
    %6 = vector.load %arg4[%c0_5, %c0_6] : memref<8x128xf32, #tpu.memory_space<vmem>>, vector<8x128xf32>
    tpu.vector_store %arg4[%c0_5, %c0_6], %5 {strides = array<i32>} : memref<8x128xf32, #tpu.memory_space<vmem>>, vector<8x128xf32>,
    return
  }
  func.func @transform_0(%arg0: i32) -> (i32, i32) {
    %c0_i32 = arith.constant 0 : i32
    %c0_i32_0 = arith.constant 0 : i32
    return %arg0, %c0_i32 : i32, i32
  }
  func.func @transform_1(%arg0: i32) -> (i32, i32) {
    %c0_i32 = arith.constant 0 : i32
    %c0_i32_0 = arith.constant 0 : i32
    %c0_i32_1 = arith.constant 0 : i32
    return %c0_i32, %c0_i32_0 : i32, i32
  }
  func.func @transform_2(%arg0: i32) -> (i32, i32) {
    %c0_i32 = arith.constant 0 : i32
    %c0_i32_0 = arith.constant 0 : i32
    %c0_i32_1 = arith.constant 0 : i32
    return %c0_i32, %c0_i32_0 : i32, i32
  }
  func.func @transform_3(%arg0: i32) -> (i32, i32) {
    %c0_i32 = arith.constant 0 : i32
    %c0_i32_0 = arith.constant 0 : i32
    return %arg0, %c0_i32 : i32, i32
  }
}

module attributes {stable_mosaic.version = 11 : i64} {
  func.func @_linear_kernel(%arg0: i32, %arg1: memref<16x128xf32, #tpu.memory_space<vmem>>, %arg2: memref<128x128xf32, #tpu.memory_space<vmem>>, %arg3: memref<1x128xf32, #tpu.memory_space<vmem>>, %arg4: memref<16x128xf32, #tpu.memory_space<vmem>>) attributes {dimension_semantics = [#tpu.dimension_semantics<parallel>], iteration_bounds = array<i64: 1>, scalar_prefetch = 0 : i64, scratch_operands = 0 : i64, tpu.core_type = #tpu.core_type<tc>, window_params = [{transform_indices = @transform_0, window_bounds = array<i64: 16, 128>}, {pipeline_mode = #tpu.pipeline_mode<synchronous>, transform_indices = @transform_1, window_bounds = array<i64: 128, 128>}, {pipeline_mode = #tpu.pipeline_mode<synchronous>, transform_indices = @transform_2, window_bounds = array<i64: 1, 128>}, {transform_indices = @transform_3, window_bounds = array<i64: 16, 128>}]} {
    %c0 = arith.constant 0 : index
    %c0_0 = arith.constant 0 : index
    %0 = vector.load %arg1[%c0, %c0_0] : memref<16x128xf32, #tpu.memory_space<vmem>>, vector<16x128xf32>
    %c0_1 = arith.constant 0 : index
    %c0_2 = arith.constant 0 : index
    %1 = vector.load %arg2[%c0_1, %c0_2] : memref<128x128xf32, #tpu.memory_space<vmem>>, vector<128x128xf32>
    %cst = arith.constant dense<0.000000e+00> : vector<16x128xf32>
    %2 = tpu.matmul %0, %1, %cst {dimension_numbers = #tpu.dot_dimension_numbers<[1], [1], [0], [0], [0, 0, 1, 0], [], []>} : vector<16x128xf32>, vector<128x128xf32>, vector<16x128xf32> -> vector<16x128xf32>
    %c0_3 = arith.constant 0 : index
    %c0_4 = arith.constant 0 : index
    %3 = vector.load %arg3[%c0_3, %c0_4] : memref<1x128xf32, #tpu.memory_space<vmem>>, vector<1x128xf32>
    %4 = vector.broadcast %3 : vector<1x128xf32> to vector<16x128xf32>
    %5 = arith.addf %2, %4 : vector<16x128xf32>
    %c0_5 = arith.constant 0 : index
    %c0_6 = arith.constant 0 : index
    %6 = vector.load %arg4[%c0_5, %c0_6] : memref<16x128xf32, #tpu.memory_space<vmem>>, vector<16x128xf32>
    tpu.vector_store %arg4[%c0_5, %c0_6], %5 {strides = array<i32>} : memref<16x128xf32, #tpu.memory_space<vmem>>, vector<16x128xf32>,
    return
  }
  func.func @transform_0(%arg0: i32) -> (i32, i32) {
    %c0_i32 = arith.constant 0 : i32
    %c0_i32_0 = arith.constant 0 : i32
    return %arg0, %c0_i32 : i32, i32
  }
  func.func @transform_1(%arg0: i32) -> (i32, i32) {
    %c0_i32 = arith.constant 0 : i32
    %c0_i32_0 = arith.constant 0 : i32
    %c0_i32_1 = arith.constant 0 : i32
    return %c0_i32, %c0_i32_0 : i32, i32
  }
  func.func @transform_2(%arg0: i32) -> (i32, i32) {
    %c0_i32 = arith.constant 0 : i32
    %c0_i32_0 = arith.constant 0 : i32
    %c0_i32_1 = arith.constant 0 : i32
    return %c0_i32, %c0_i32_0 : i32, i32
  }
  func.func @transform_3(%arg0: i32) -> (i32, i32) {
    %c0_i32 = arith.constant 0 : i32
    %c0_i32_0 = arith.constant 0 : i32
    return %arg0, %c0_i32 : i32, i32
  }
}

module attributes {stable_mosaic.version = 11 : i64} {
  func.func @_attn_kernel(%arg0: i32, %arg1: i32, %arg2: memref<8x128xf32, #tpu.memory_space<vmem>>, %arg3: memref<16x128xf32, #tpu.memory_space<vmem>>, %arg4: memref<16x128xf32, #tpu.memory_space<vmem>>, %arg5: memref<8x128xf32, #tpu.memory_space<vmem>>, %arg6: memref<8x128xf32, #tpu.memory_space<vmem>>, %arg7: memref<8x1xf32, #tpu.memory_space<vmem>>) attributes {dimension_semantics = [#tpu.dimension_semantics<parallel>, #tpu.dimension_semantics<arbitrary>], iteration_bounds = array<i64: 1, 1>, scalar_prefetch = 0 : i64, scratch_operands = 2 : i64, tpu.core_type = #tpu.core_type<tc>, window_params = [{transform_indices = @transform_0, window_bounds = array<i64: 8, 128>}, {transform_indices = @transform_1, window_bounds = array<i64: 16, 128>}, {transform_indices = @transform_2, window_bounds = array<i64: 16, 128>}, {transform_indices = @transform_3, window_bounds = array<i64: 8, 128>}]} {
    %c0_i32 = arith.constant 0 : i32
    %0 = arith.cmpi eq, %arg1, %c0_i32 : i32
    %1 = arith.extui %0 : i1 to i32
    %c0_i32_0 = arith.constant 0 : i32
    %2 = arith.cmpi ne, %1, %c0_i32_0 : i32
    scf.if %2 {
      %cst_19 = arith.constant 0.000000e+00 : f32
      %22 = vector.broadcast %cst_19 : f32 to vector<8x128xf32>
      %c0_20 = arith.constant 0 : index
      %c0_21 = arith.constant 0 : index
      %23 = vector.load %arg6[%c0_20, %c0_21] : memref<8x128xf32, #tpu.memory_space<vmem>>, vector<8x128xf32>
      tpu.vector_store %arg6[%c0_20, %c0_21], %22 {strides = array<i32>} : memref<8x128xf32, #tpu.memory_space<vmem>>, vector<8x128xf32>,
      %cst_22 = arith.constant 0.000000e+00 : f32
      %24 = vector.broadcast %cst_22 : f32 to vector<8x1xf32>
      %c0_23 = arith.constant 0 : index
      %c0_24 = arith.constant 0 : index
      %25 = vector.load %arg7[%c0_23, %c0_24] : memref<8x1xf32, #tpu.memory_space<vmem>>, vector<8x1xf32>
      tpu.vector_store %arg7[%c0_23, %c0_24], %24 {strides = array<i32>} : memref<8x1xf32, #tpu.memory_space<vmem>>, vector<8x1xf32>,
    } else {
    }
    %c0 = arith.constant 0 : index
    %c0_1 = arith.constant 0 : index
    %3 = vector.load %arg2[%c0, %c0_1] : memref<8x128xf32, #tpu.memory_space<vmem>>, vector<8x128xf32>
    %c0_2 = arith.constant 0 : index
    %c0_3 = arith.constant 0 : index
    %4 = vector.load %arg3[%c0_2, %c0_3] : memref<16x128xf32, #tpu.memory_space<vmem>>, vector<16x128xf32>
    %cst = arith.constant dense<0.000000e+00> : vector<8x16xf32>
    %5 = tpu.matmul %3, %4, %cst {dimension_numbers = #tpu.dot_dimension_numbers<[1], [1], [0], [0], [0, 0, 1, 0], [], []>} : vector<8x128xf32>, vector<16x128xf32>, vector<8x16xf32> -> vector<8x16xf32>
    %cst_4 = arith.constant 0.000000e+00 : f32
    %6 = vector.broadcast %cst_4 : f32 to vector<8x16xf32>
    %7 = arith.maximumf %5, %6 : vector<8x16xf32>
    %c0_5 = arith.constant 0 : index
    %c0_6 = arith.constant 0 : index
    %8 = vector.load %arg7[%c0_5, %c0_6] : memref<8x1xf32, #tpu.memory_space<vmem>>, vector<8x1xf32>
    %9 = arith.mulf %7, %7 : vector<8x16xf32>
    %cst_7 = arith.constant dense<0.000000e+00> : vector<8xf32>
    %10 = vector.multi_reduction <add>, %9, %cst_7 [1] : vector<8x16xf32> to vector<8xf32>
    %11 = vector.shape_cast %10 : vector<8xf32> to vector<8x1xf32>
    %12 = arith.addf %8, %11 : vector<8x1xf32>
    %c0_8 = arith.constant 0 : index
    %c0_9 = arith.constant 0 : index
    %13 = vector.load %arg7[%c0_8, %c0_9] : memref<8x1xf32, #tpu.memory_space<vmem>>, vector<8x1xf32>
    tpu.vector_store %arg7[%c0_8, %c0_9], %12 {strides = array<i32>} : memref<8x1xf32, #tpu.memory_space<vmem>>, vector<8x1xf32>,
    %c0_10 = arith.constant 0 : index
    %c0_11 = arith.constant 0 : index
    %14 = vector.load %arg6[%c0_10, %c0_11] : memref<8x128xf32, #tpu.memory_space<vmem>>, vector<8x128xf32>
    %c0_12 = arith.constant 0 : index
    %c0_13 = arith.constant 0 : index
    %15 = vector.load %arg4[%c0_12, %c0_13] : memref<16x128xf32, #tpu.memory_space<vmem>>, vector<16x128xf32>
    %cst_14 = arith.constant dense<0.000000e+00> : vector<8x128xf32>
    %16 = tpu.matmul %7, %15, %cst_14 {dimension_numbers = #tpu.dot_dimension_numbers<[1], [0], [0], [1], [0, 0, 1, 1], [], []>} : vector<8x16xf32>, vector<16x128xf32>, vector<8x128xf32> -> vector<8x128xf32>
    %17 = arith.addf %14, %16 : vector<8x128xf32>
    %c0_15 = arith.constant 0 : index
    %c0_16 = arith.constant 0 : index
    %18 = vector.load %arg6[%c0_15, %c0_16] : memref<8x128xf32, #tpu.memory_space<vmem>>, vector<8x128xf32>
    tpu.vector_store %arg6[%c0_15, %c0_16], %17 {strides = array<i32>} : memref<8x128xf32, #tpu.memory_space<vmem>>, vector<8x128xf32>,
    %c0_i32_17 = arith.constant 0 : i32
    %19 = arith.cmpi eq, %arg1, %c0_i32_17 : i32
    %20 = arith.extui %19 : i1 to i32
    %c0_i32_18 = arith.constant 0 : i32
    %21 = arith.cmpi ne, %20, %c0_i32_18 : i32
    scf.if %21 {
      %c0_19 = arith.constant 0 : index
      %c0_20 = arith.constant 0 : index
      %22 = vector.load %arg7[%c0_19, %c0_20] : memref<8x1xf32, #tpu.memory_space<vmem>>, vector<8x1xf32>
      %cst_21 = arith.constant 1.000000e-24 : f32
      %23 = vector.broadcast %cst_21 : f32 to vector<8x1xf32>
      %24 = arith.maximumf %22, %23 : vector<8x1xf32>
      %25 = math.rsqrt %24 : vector<8x1xf32>
      %c0_22 = arith.constant 0 : index
      %c0_23 = arith.constant 0 : index
      %26 = vector.load %arg6[%c0_22, %c0_23] : memref<8x128xf32, #tpu.memory_space<vmem>>, vector<8x128xf32>
      %27 = vector.broadcast %25 : vector<8x1xf32> to vector<8x128xf32>
      %28 = arith.mulf %26, %27 : vector<8x128xf32>
      %c0_24 = arith.constant 0 : index
      %c0_25 = arith.constant 0 : index
      %29 = vector.load %arg5[%c0_24, %c0_25] : memref<8x128xf32, #tpu.memory_space<vmem>>, vector<8x128xf32>
      tpu.vector_store %arg5[%c0_24, %c0_25], %28 {strides = array<i32>} : memref<8x128xf32, #tpu.memory_space<vmem>>, vector<8x128xf32>,
    } else {
    }
    return
  }
  func.func @transform_0(%arg0: i32, %arg1: i32) -> (i32, i32) {
    %c0_i32 = arith.constant 0 : i32
    %c0_i32_0 = arith.constant 0 : i32
    return %arg0, %c0_i32 : i32, i32
  }
  func.func @transform_1(%arg0: i32, %arg1: i32) -> (i32, i32) {
    %c0_i32 = arith.constant 0 : i32
    %c0_i32_0 = arith.constant 0 : i32
    return %arg1, %c0_i32 : i32, i32
  }
  func.func @transform_2(%arg0: i32, %arg1: i32) -> (i32, i32) {
    %c0_i32 = arith.constant 0 : i32
    %c0_i32_0 = arith.constant 0 : i32
    return %arg1, %c0_i32 : i32, i32
  }
  func.func @transform_3(%arg0: i32, %arg1: i32) -> (i32, i32) {
    %c0_i32 = arith.constant 0 : i32
    %c0_i32_0 = arith.constant 0 : i32
    return %arg0, %c0_i32 : i32, i32
  }
}

</mosaic_0001>

<llo_original>
// kernel: attention_forward.5
$region0: #{attention_forward.5}
  #allocation0 [shape = 'u32[]', space=smem, size = 0x4, offset = 0x4, fixed_abs, tag = 'smem constant byte address 0x4 - core index']
  #allocation1 [shape = 'u32[144,128]{1,0:T(1,128)}', space=vmem, size = 0x12000, scoped, tag = 'internal scratch']
  #allocation2 [shape = 'f32[8,128]{1,0:T(8,128)}', space=vmem, size = 0x1000, scoped, tag = 'scratch operand']
  #allocation3 [shape = 'f32[8,1]{1,0:T(8,128)}', space=vmem, size = 0x1000, scoped, tag = 'scratch operand']
  %s0 = inlined_call_operand.vmem [shape: f32[8,128], index: 0, kind: input, shape index: {}]
  %s1 = inlined_call_operand.vmem [shape: f32[16,128], index: 1, kind: input, shape index: {}]
  %s2 = inlined_call_operand.vmem [shape: f32[16,128], index: 2, kind: input, shape index: {}]
  %s3 = inlined_call_operand.hbm [shape: f32[8,128], index: 3, kind: output, shape index: {}]
  %s4 = sld [smem:[#allocation0]]
  $region30: #{attention_forward.5} parent=0
    _
  %s6 = ssub.s32 1, %s4
  %s7 = scalar_select 0, %s6, %s4
  $region1: #{attention_forward.5} parent=0
    #allocation4 [shape = 'u8[4096]{0}', space=vmem, size = 0x1000, scoped, tag = 'output window, operand 0, single buffered']
    #allocation5 [shape = 's32[1]{0}', space=sflag, size = 0x4, scoped, tag = 'scoped memory for attention_forward.5']
    %8 = vsyncpa [#allocation5], 0
    // Predicated region
    $region2: #{attention_forward.5} parent=1 // pred_check
      _
    $region3: #{attention_forward.5} parent=1 // pred_check_branch
      %10 = sbr.rel (0) target = $region5
    $region4: #{attention_forward.5} parent=1 // pred_region
      _
    $region5: #{attention_forward.5} parent=1 // pred_fallthru
      _
    // Predicated region
    $region6: #{attention_forward.5} parent=1 // pred_check
      _
    $region7: #{attention_forward.5} parent=1 // pred_check_branch
      %12 = sbr.rel (0) target = $region9
    $region8: #{attention_forward.5} parent=1 // pred_region
      _
    $region9: #{attention_forward.5} parent=1 // pred_fallthru
      _
    // Predicated region
    $region10: #{attention_forward.5} parent=1 // pred_check
      _
    $region11: #{attention_forward.5} parent=1 // pred_check_branch
      %14 = sbr.rel (0) target = $region13
    $region12: #{attention_forward.5} parent=1 // pred_region
      _
    $region13: #{attention_forward.5} parent=1 // pred_fallthru
      _
    %p15 = scmp.eq.s32.totalorder 0, 0
    // Predicated region
    $region14: #{attention_forward.5} parent=1 // pred_check
      %p16 = pneg %p15
    $region15: #{attention_forward.5} parent=1 // pred_check_branch
      %18 = sbr.rel (%p16) target = $region17
    $region16: #{attention_forward.5} parent=1 // pred_region
      %19 = vst [vmem:[#allocation2] sm:$0xff] 0.0
      %vm20 = vcmask 7168
      %21 = vst.msk [vmem:[#allocation3] sm:$0xff] %vm20, 0.0
    $region17: #{attention_forward.5} parent=1 // pred_fallthru
      _
    %v22 = vld [vmem:[%s0] sm:$0xff]
    %v23 = vld [vmem:[%s1] sm:$0xff]
    %v24 = vld [vmem:[%s1 + $0x8] sm:$0xff]
    %25 = vmatprep.subr.mxu0 0.0
    %26 = vmatpush1.xpose.msra.mxu0 0.0
    %27 = vmatprep.subr.mxu0 0.0
    %28 = vmatpush1.xpose.msra.mxu0 0.0
    %29 = vmatprep.subr.mxu0 0.0
    %30 = vmatpush1.xpose.msra.mxu0 0.0
    %31 = vmatprep.subr.mxu0 0.0
    %32 = vmatpush1.xpose.msra.mxu0 0.0
    %33 = vmatprep.subr.mxu0 0.0
    %34 = vmatpush1.xpose.msra.mxu0 0.0
    %35 = vmatprep.subr.mxu0 0.0
    %36 = vmatpush1.xpose.msra.mxu0 0.0
    %37 = vmatprep.subr.mxu0 0.0
    %38 = vmatpush1.xpose.msra.mxu0 0.0
    %39 = vmatprep.subr.mxu0 0.0
    %40 = vmatpush1.xpose.msra.mxu0 0.0
    %41 = vmatprep.subr.mxu0 0.0
    %42 = vmatpush1.xpose.msra.mxu0 0.0
    %43 = vmatprep.subr.mxu0 0.0
    %44 = vmatpush1.xpose.msra.mxu0 0.0
    %45 = vmatprep.subr.mxu0 0.0
    %46 = vmatpush1.xpose.msra.mxu0 0.0
    %47 = vmatprep.subr.mxu0 0.0
    %48 = vmatpush1.xpose.msra.mxu0 0.0
    %49 = vmatprep.subr.mxu0 0.0
    %50 = vmatpush1.xpose.msra.mxu0 0.0
    %51 = vmatprep.subr.mxu0 0.0
    %52 = vmatpush1.xpose.msra.mxu0 0.0
    %53 = vmatprep.subr.mxu0 0.0
    %54 = vmatpush1.xpose.msra.mxu0 %v24
    %55 = vmatprep.subr.mxu0 0.0
    %56 = vmatpush1.xpose.msra.mxu0 %v23
    %57 = vmatprep.subr.mxu0 0.0
    %58 = vmatpush2.xpose.msra.mxu0 0.0
    %59 = vmatprep.subr.mxu0 0.0
    %60 = vmatpush2.xpose.msra.mxu0 0.0
    %61 = vmatprep.subr.mxu0 0.0
    %62 = vmatpush2.xpose.msra.mxu0 0.0
    %63 = vmatprep.subr.mxu0 0.0
    %64 = vmatpush2.xpose.msra.mxu0 0.0
    %65 = vmatprep.subr.mxu0 0.0
    %66 = vmatpush2.xpose.msra.mxu0 0.0
    %67 = vmatprep.subr.mxu0 0.0
    %68 = vmatpush2.xpose.msra.mxu0 0.0
    %69 = vmatprep.subr.mxu0 0.0
    %70 = vmatpush2.xpose.msra.mxu0 0.0
    %71 = vmatprep.subr.mxu0 0.0
    %72 = vmatpush2.xpose.msra.mxu0 0.0
    %73 = vmatprep.subr.mxu0 0.0
    %74 = vmatpush2.xpose.msra.mxu0 0.0
    %75 = vmatprep.subr.mxu0 0.0
    %76 = vmatpush2.xpose.msra.mxu0 0.0
    %77 = vmatprep.subr.mxu0 0.0
    %78 = vmatpush2.xpose.msra.mxu0 0.0
    %79 = vmatprep.subr.mxu0 0.0
    %80 = vmatpush2.xpose.msra.mxu0 0.0
    %81 = vmatprep.subr.mxu0 0.0
    %82 = vmatpush2.xpose.msra.mxu0 0.0
    %83 = vmatprep.subr.mxu0 0.0
    %84 = vmatpush2.xpose.msra.mxu0 0.0
    %85 = vmatprep.subr.mxu0 0.0
    %86 = vmatpush2.xpose.msra.mxu0 0.0
    %87 = vmatprep.subr.mxu0 0.0
    %88 = vmatpush2.xpose.msra.mxu0 0.0
    %89 = vmatprep.mubr.f32.mxu0 0.0
    %90 = vmatmul.mubr.f32.gmra.mxu0 %v22
    %v91 = vpop.f32.mrf.mxu0
    %v92 = vadd.f32 0.0, %v91
    %v93 = vpop.f32.mrf.mxu0
    %94 = vdwg.mxu0
    %v95 = vmax.f32 %v92, 0.0
    %v96 = vld [vmem:[#allocation3] sm:$0xff]
    %v97 = vmul.f32 %v95, %v95
    %vm98 = vcmask 130048
    %v99 = vsel %vm98, %v97, 0.0
    %100 = vadd.xlane.f32.xlu0 %v99
    %v101 = vpop.xlane.xlu0 %100
    %v102 = vadd.f32 %v96, %v101
    %vm103 = vcmask 7168
    %104 = vst.msk [vmem:[#allocation3] sm:$0xff] %vm103, %v102
    %v105 = vld [vmem:[#allocation2] sm:$0xff]
    %v106 = vld [vmem:[%s2] sm:$0xff]
    %v107 = vld [vmem:[%s2 + $0x8] sm:$0xff]
    %v109 = vsel %vm98, %v95, 0
    %111 = vmatprep.subr.mxu0 0.0
    %112 = vmatpush1.msra.mxu0 0.0
    %113 = vmatprep.subr.mxu0 0.0
    %114 = vmatpush1.msra.mxu0 0.0
    %115 = vmatprep.subr.mxu0 0.0
    %116 = vmatpush1.msra.mxu0 0.0
    %117 = vmatprep.subr.mxu0 0.0
    %118 = vmatpush1.msra.mxu0 0.0
    %119 = vmatprep.subr.mxu0 0.0
    %120 = vmatpush1.msra.mxu0 0.0
    %121 = vmatprep.subr.mxu0 0.0
    %122 = vmatpush1.msra.mxu0 0.0
    %123 = vmatprep.subr.mxu0 0.0
    %124 = vmatpush1.msra.mxu0 0.0
    %125 = vmatprep.subr.mxu0 0.0
    %126 = vmatpush1.msra.mxu0 0.0
    %127 = vmatprep.subr.mxu0 0.0
    %128 = vmatpush1.msra.mxu0 0.0
    %129 = vmatprep.subr.mxu0 0.0
    %130 = vmatpush1.msra.mxu0 0.0
    %131 = vmatprep.subr.mxu0 0.0
    %132 = vmatpush1.msra.mxu0 0.0
    %133 = vmatprep.subr.mxu0 0.0
    %134 = vmatpush1.msra.mxu0 0.0
    %135 = vmatprep.subr.mxu0 0.0
    %136 = vmatpush1.msra.mxu0 0.0
    %137 = vmatprep.subr.mxu0 0.0
    %138 = vmatpush1.msra.mxu0 0.0
    %139 = vmatprep.subr.mxu0 0.0
    %140 = vmatpush1.msra.mxu0 %v107
    %141 = vmatprep.subr.mxu0 0.0
    %142 = vmatpush1.msra.mxu0 %v106
    %143 = vmatprep.subr.mxu0 0.0
    %144 = vmatpush2.msra.mxu0 0.0
    %145 = vmatprep.subr.mxu0 0.0
    %146 = vmatpush2.msra.mxu0 0.0
    %147 = vmatprep.subr.mxu0 0.0
    %148 = vmatpush2.msra.mxu0 0.0
    %149 = vmatprep.subr.mxu0 0.0
    %150 = vmatpush2.msra.mxu0 0.0
    %151 = vmatprep.subr.mxu0 0.0
    %152 = vmatpush2.msra.mxu0 0.0
    %153 = vmatprep.subr.mxu0 0.0
    %154 = vmatpush2.msra.mxu0 0.0
    %155 = vmatprep.subr.mxu0 0.0
    %156 = vmatpush2.msra.mxu0 0.0
    %157 = vmatprep.subr.mxu0 0.0
    %158 = vmatpush2.msra.mxu0 0.0
    %159 = vmatprep.subr.mxu0 0.0
    %160 = vmatpush2.msra.mxu0 0.0
    %161 = vmatprep.subr.mxu0 0.0
    %162 = vmatpush2.msra.mxu0 0.0
    %163 = vmatprep.subr.mxu0 0.0
    %164 = vmatpush2.msra.mxu0 0.0
    %165 = vmatprep.subr.mxu0 0.0
    %166 = vmatpush2.msra.mxu0 0.0
    %167 = vmatprep.subr.mxu0 0.0
    %168 = vmatpush2.msra.mxu0 0.0
    %169 = vmatprep.subr.mxu0 0.0
    %170 = vmatpush2.msra.mxu0 0.0
    %171 = vmatprep.subr.mxu0 0.0
    %172 = vmatpush2.msra.mxu0 0.0
    %173 = vmatprep.subr.mxu0 0.0
    %174 = vmatpush2.msra.mxu0 0.0
    %175 = vmatprep.mubr.f32.mxu0 0.0
    %176 = vmatmul.mubr.f32.gmra.mxu0 %v109
    %v177 = vpop.f32.mrf.mxu0
    %v178 = vadd.f32 0.0, %v177
    %v179 = vpop.f32.mrf.mxu0
    %180 = vdwg.mxu0
    %v181 = vadd.f32 %v105, %v178
    %182 = vst [vmem:[#allocation2] sm:$0xff] %v181
    // Predicated region
    $region18: #{attention_forward.5} parent=1 // pred_check
      %p183 = pneg %p15
    $region19: #{attention_forward.5} parent=1 // pred_check_branch
      %185 = sbr.rel (%p183) target = $region21
    $region20: #{attention_forward.5} parent=1 // pred_region
      %v186 = vld [vmem:[#allocation3] sm:$0xff]
      %v187 = vmax.f32 %v186, 1e-24
      %v188 = vrsqrt.pop %v187
      %v189 = vld [vmem:[#allocation2] sm:$0xff]
      %191 = vset.pattern.permute.xlu0 0
      %192 = vperm.xlu0 %191, %v188
      %v193 = vpop.permute.xlu0 %192
      %v195 = vmul.f32 %v189, %v193
      %196 = vst [vmem:[#allocation4] sm:$0xff] %v195
    $region21: #{attention_forward.5} parent=1 // pred_fallthru
      _
    // Predicated region
    $region22: #{attention_forward.5} parent=1 // pred_check
      _
    $region23: #{attention_forward.5} parent=1 // pred_check_branch
      %198 = sbr.rel (0) target = $region25
    $region24: #{attention_forward.5} parent=1 // pred_region
      %s200 = ssub.s32 128, 128
      %201 = vsyncadd [#allocation5], %s200
      %s203 = sshll.u32 [#allocation4], 4
      %s204 = int_to_ptr.vmem [resolvable:$true] %s203
      %206 = dma.vmem_to_hbm [thread:$0]  %s204, 128, %s3, [#allocation5]
    $region25: #{attention_forward.5} parent=1 // pred_fallthru
      _
    // Predicated region
    $region26: #{attention_forward.5} parent=1 // pred_check
      _
    $region27: #{attention_forward.5} parent=1 // pred_check_branch
      %208 = sbr.rel (0) target = $region29
    $region28: #{attention_forward.5} parent=1 // pred_region
      %209 = dma.done [#allocation5], 128
    $region29: #{attention_forward.5} parent=1 // pred_fallthru
      _
    %210 = vsyncpa [#allocation5], 1

// kernel: attention_forward.3
$region0: #{attention_forward.3}
  #allocation0 [shape = 'u32[]', space=smem, size = 0x4, offset = 0x4, fixed_abs, tag = 'smem constant byte address 0x4 - core index']
  #allocation1 [shape = 'u32[144,128]{1,0:T(1,128)}', space=vmem, size = 0x12000, scoped, tag = 'internal scratch']
  %s0 = inlined_call_operand.vmem [shape: f32[8,128], index: 0, kind: input, shape index: {}]
  %s1 = inlined_call_operand.vmem [shape: f32[128,128], index: 1, kind: input, shape index: {}]
  %s2 = inlined_call_operand.vmem [shape: f32[1,128], index: 2, kind: input, shape index: {}]
  %s3 = inlined_call_operand.vmem [shape: f32[8,128], index: 3, kind: output, shape index: {}]
  %s4 = sld [smem:[#allocation0]]
  $region22: #{attention_forward.3} parent=0
    _
  %s6 = ssub.s32 1, %s4
  %s7 = scalar_select 0, %s6, %s4
  // Predicated region
  $region2: #{attention_forward.3} parent=0 // pred_check
    _
  $region3: #{attention_forward.3} parent=0 // pred_check_branch
    %9 = sbr.rel (0) target = $region5
  $region4: #{attention_forward.3} parent=0 // pred_region
    _
  $region5: #{attention_forward.3} parent=0 // pred_fallthru
    _
  // Predicated region
  $region6: #{attention_forward.3} parent=0 // pred_check
    _
  $region7: #{attention_forward.3} parent=0 // pred_check_branch
    %11 = sbr.rel (0) target = $region9
  $region8: #{attention_forward.3} parent=0 // pred_region
    _
  $region9: #{attention_forward.3} parent=0 // pred_fallthru
    _
  // Predicated region
  $region10: #{attention_forward.3} parent=0 // pred_check
    _
  $region11: #{attention_forward.3} parent=0 // pred_check_branch
    %13 = sbr.rel (0) target = $region13
  $region12: #{attention_forward.3} parent=0 // pred_region
    _
  $region13: #{attention_forward.3} parent=0 // pred_fallthru
    _
  %v14 = vld [vmem:[%s0] sm:$0xff]
  %v15 = vld [vmem:[%s1] sm:$0xff]
  %v16 = vld [vmem:[%s1 + $0x8] sm:$0xff]
  %v17 = vld [vmem:[%s1 + $0x10] sm:$0xff]
  %v18 = vld [vmem:[%s1 + $0x18] sm:$0xff]
  %v19 = vld [vmem:[%s1 + $0x20] sm:$0xff]
  %v20 = vld [vmem:[%s1 + $0x28] sm:$0xff]
  %v21 = vld [vmem:[%s1 + $0x30] sm:$0xff]
  %v22 = vld [vmem:[%s1 + $0x38] sm:$0xff]
  %v23 = vld [vmem:[%s1 + $0x40] sm:$0xff]
  %v24 = vld [vmem:[%s1 + $0x48] sm:$0xff]
  %v25 = vld [vmem:[%s1 + $0x50] sm:$0xff]
  %v26 = vld [vmem:[%s1 + $0x58] sm:$0xff]
  %v27 = vld [vmem:[%s1 + $0x60] sm:$0xff]
  %v28 = vld [vmem:[%s1 + $0x68] sm:$0xff]
  %v29 = vld [vmem:[%s1 + $0x70] sm:$0xff]
  %v30 = vld [vmem:[%s1 + $0x78] sm:$0xff]
  %v31 = vld [vmem:[%s2] sm:$0x1]
  %v33 = vlaneseq
  %v34 = vshrl.u32 %v33, 7
  %v35 = vsub.s32 0, %v34
  %v36 = vrot.slane %v31, %v35
  %38 = vmatprep.subr.mxu0 0.0
  %39 = vmatpush1.xpose.msra.mxu0 %v30
  %40 = vmatprep.subr.mxu0 0.0
  %41 = vmatpush1.xpose.msra.mxu0 %v29
  %42 = vmatprep.subr.mxu0 0.0
  %43 = vmatpush1.xpose.msra.mxu0 %v28
  %44 = vmatprep.subr.mxu0 0.0
  %45 = vmatpush1.xpose.msra.mxu0 %v27
  %46 = vmatprep.subr.mxu0 0.0
  %47 = vmatpush1.xpose.msra.mxu0 %v26
  %48 = vmatprep.subr.mxu0 0.0
  %49 = vmatpush1.xpose.msra.mxu0 %v25
  %50 = vmatprep.subr.mxu0 0.0
  %51 = vmatpush1.xpose.msra.mxu0 %v24
  %52 = vmatprep.subr.mxu0 0.0
  %53 = vmatpush1.xpose.msra.mxu0 %v23
  %54 = vmatprep.subr.mxu0 0.0
  %55 = vmatpush1.xpose.msra.mxu0 %v22
  %56 = vmatprep.subr.mxu0 0.0
  %57 = vmatpush1.xpose.msra.mxu0 %v21
  %58 = vmatprep.subr.mxu0 0.0
  %59 = vmatpush1.xpose.msra.mxu0 %v20
  %60 = vmatprep.subr.mxu0 0.0
  %61 = vmatpush1.xpose.msra.mxu0 %v19
  %62 = vmatprep.subr.mxu0 0.0
  %63 = vmatpush1.xpose.msra.mxu0 %v18
  %64 = vmatprep.subr.mxu0 0.0
  %65 = vmatpush1.xpose.msra.mxu0 %v17
  %66 = vmatprep.subr.mxu0 0.0
  %67 = vmatpush1.xpose.msra.mxu0 %v16
  %68 = vmatprep.subr.mxu0 0.0
  %69 = vmatpush1.xpose.msra.mxu0 %v15
  %70 = vmatprep.subr.mxu0 0.0
  %71 = vmatpush2.xpose.msra.mxu0 0.0
  %72 = vmatprep.subr.mxu0 0.0
  %73 = vmatpush2.xpose.msra.mxu0 0.0
  %74 = vmatprep.subr.mxu0 0.0
  %75 = vmatpush2.xpose.msra.mxu0 0.0
  %76 = vmatprep.subr.mxu0 0.0
  %77 = vmatpush2.xpose.msra.mxu0 0.0
  %78 = vmatprep.subr.mxu0 0.0
  %79 = vmatpush2.xpose.msra.mxu0 0.0
  %80 = vmatprep.subr.mxu0 0.0
  %81 = vmatpush2.xpose.msra.mxu0 0.0
  %82 = vmatprep.subr.mxu0 0.0
  %83 = vmatpush2.xpose.msra.mxu0 0.0
  %84 = vmatprep.subr.mxu0 0.0
  %85 = vmatpush2.xpose.msra.mxu0 0.0
  %86 = vmatprep.subr.mxu0 0.0
  %87 = vmatpush2.xpose.msra.mxu0 0.0
  %88 = vmatprep.subr.mxu0 0.0
  %89 = vmatpush2.xpose.msra.mxu0 0.0
  %90 = vmatprep.subr.mxu0 0.0
  %91 = vmatpush2.xpose.msra.mxu0 0.0
  %92 = vmatprep.subr.mxu0 0.0
  %93 = vmatpush2.xpose.msra.mxu0 0.0
  %94 = vmatprep.subr.mxu0 0.0
  %95 = vmatpush2.xpose.msra.mxu0 0.0
  %96 = vmatprep.subr.mxu0 0.0
  %97 = vmatpush2.xpose.msra.mxu0 0.0
  %98 = vmatprep.subr.mxu0 0.0
  %99 = vmatpush2.xpose.msra.mxu0 0.0
  %100 = vmatprep.subr.mxu0 0.0
  %101 = vmatpush2.xpose.msra.mxu0 0.0
  %102 = vmatprep.mubr.f32.mxu0 0.0
  %103 = vmatmul.mubr.f32.gmra.mxu0 %v14
  %v104 = vpop.f32.mrf.mxu0
  %v105 = vadd.f32 %v36, %v104
  %v106 = vpop.f32.mrf.mxu0
  %107 = vdwg.mxu0
  %108 = vst [vmem:[%s3] sm:$0xff] %v105
  // Predicated region
  $region14: #{attention_forward.3} parent=0 // pred_check
    _
  $region15: #{attention_forward.3} parent=0 // pred_check_branch
    %110 = sbr.rel (0) target = $region17
  $region16: #{attention_forward.3} parent=0 // pred_region
    _
  $region17: #{attention_forward.3} parent=0 // pred_fallthru
    _
  // Predicated region
  $region18: #{attention_forward.3} parent=0 // pred_check
    _
  $region19: #{attention_forward.3} parent=0 // pred_check_branch
    %112 = sbr.rel (0) target = $region21
  $region20: #{attention_forward.3} parent=0 // pred_region
    _
  $region21: #{attention_forward.3} parent=0 // pred_fallthru
    _

// kernel: attention_forward.4
$region0: #{attention_forward.4}
  #allocation0 [shape = 'u32[]', space=smem, size = 0x4, offset = 0x4, fixed_abs, tag = 'smem constant byte address 0x4 - core index']
  #allocation1 [shape = 'u32[144,128]{1,0:T(1,128)}', space=vmem, size = 0x12000, scoped, tag = 'internal scratch']
  %s0 = inlined_call_operand.vmem [shape: f32[16,128], index: 0, kind: input, shape index: {}]
  %s1 = inlined_call_operand.vmem [shape: f32[128,128], index: 1, kind: input, shape index: {}]
  %s2 = inlined_call_operand.vmem [shape: f32[1,128], index: 2, kind: input, shape index: {}]
  %s3 = inlined_call_operand.vmem [shape: f32[16,128], index: 3, kind: output, shape index: {}]
  %s4 = sld [smem:[#allocation0]]
  $region22: #{attention_forward.4} parent=0
    _
  %s6 = ssub.s32 1, %s4
  %s7 = scalar_select 0, %s6, %s4
  // Predicated region
  $region2: #{attention_forward.4} parent=0 // pred_check
    _
  $region3: #{attention_forward.4} parent=0 // pred_check_branch
    %9 = sbr.rel (0) target = $region5
  $region4: #{attention_forward.4} parent=0 // pred_region
    _
  $region5: #{attention_forward.4} parent=0 // pred_fallthru
    _
  // Predicated region
  $region6: #{attention_forward.4} parent=0 // pred_check
    _
  $region7: #{attention_forward.4} parent=0 // pred_check_branch
    %11 = sbr.rel (0) target = $region9
  $region8: #{attention_forward.4} parent=0 // pred_region
    _
  $region9: #{attention_forward.4} parent=0 // pred_fallthru
    _
  // Predicated region
  $region10: #{attention_forward.4} parent=0 // pred_check
    _
  $region11: #{attention_forward.4} parent=0 // pred_check_branch
    %13 = sbr.rel (0) target = $region13
  $region12: #{attention_forward.4} parent=0 // pred_region
    _
  $region13: #{attention_forward.4} parent=0 // pred_fallthru
    _
  %v14 = vld [vmem:[%s0] sm:$0xff]
  %v15 = vld [vmem:[%s0 + $0x8] sm:$0xff]
  %v16 = vld [vmem:[%s1] sm:$0xff]
  %v17 = vld [vmem:[%s1 + $0x8] sm:$0xff]
  %v18 = vld [vmem:[%s1 + $0x10] sm:$0xff]
  %v19 = vld [vmem:[%s1 + $0x18] sm:$0xff]
  %v20 = vld [vmem:[%s1 + $0x20] sm:$0xff]
  %v21 = vld [vmem:[%s1 + $0x28] sm:$0xff]
  %v22 = vld [vmem:[%s1 + $0x30] sm:$0xff]
  %v23 = vld [vmem:[%s1 + $0x38] sm:$0xff]
  %v24 = vld [vmem:[%s1 + $0x40] sm:$0xff]
  %v25 = vld [vmem:[%s1 + $0x48] sm:$0xff]
  %v26 = vld [vmem:[%s1 + $0x50] sm:$0xff]
  %v27 = vld [vmem:[%s1 + $0x58] sm:$0xff]
  %v28 = vld [vmem:[%s1 + $0x60] sm:$0xff]
  %v29 = vld [vmem:[%s1 + $0x68] sm:$0xff]
  %v30 = vld [vmem:[%s1 + $0x70] sm:$0xff]
  %v31 = vld [vmem:[%s1 + $0x78] sm:$0xff]
  %v32 = vld [vmem:[%s2] sm:$0x1]
  %v34 = vlaneseq
  %v35 = vshrl.u32 %v34, 7
  %v36 = vsub.s32 0, %v35
  %v37 = vrot.slane %v32, %v36
  %39 = vmatprep.subr.mxu0 0.0
  %40 = vmatpush1.xpose.msra.mxu0 %v31
  %41 = vmatprep.subr.mxu0 0.0
  %42 = vmatpush1.xpose.msra.mxu0 %v30
  %43 = vmatprep.subr.mxu0 0.0
  %44 = vmatpush1.xpose.msra.mxu0 %v29
  %45 = vmatprep.subr.mxu0 0.0
  %46 = vmatpush1.xpose.msra.mxu0 %v28
  %47 = vmatprep.subr.mxu0 0.0
  %48 = vmatpush1.xpose.msra.mxu0 %v27
  %49 = vmatprep.subr.mxu0 0.0
  %50 = vmatpush1.xpose.msra.mxu0 %v26
  %51 = vmatprep.subr.mxu0 0.0
  %52 = vmatpush1.xpose.msra.mxu0 %v25
  %53 = vmatprep.subr.mxu0 0.0
  %54 = vmatpush1.xpose.msra.mxu0 %v24
  %55 = vmatprep.subr.mxu0 0.0
  %56 = vmatpush1.xpose.msra.mxu0 %v23
  %57 = vmatprep.subr.mxu0 0.0
  %58 = vmatpush1.xpose.msra.mxu0 %v22
  %59 = vmatprep.subr.mxu0 0.0
  %60 = vmatpush1.xpose.msra.mxu0 %v21
  %61 = vmatprep.subr.mxu0 0.0
  %62 = vmatpush1.xpose.msra.mxu0 %v20
  %63 = vmatprep.subr.mxu0 0.0
  %64 = vmatpush1.xpose.msra.mxu0 %v19
  %65 = vmatprep.subr.mxu0 0.0
  %66 = vmatpush1.xpose.msra.mxu0 %v18
  %67 = vmatprep.subr.mxu0 0.0
  %68 = vmatpush1.xpose.msra.mxu0 %v17
  %69 = vmatprep.subr.mxu0 0.0
  %70 = vmatpush1.xpose.msra.mxu0 %v16
  %71 = vmatprep.subr.mxu0 0.0
  %72 = vmatpush2.xpose.msra.mxu0 0.0
  %73 = vmatprep.subr.mxu0 0.0
  %74 = vmatpush2.xpose.msra.mxu0 0.0
  %75 = vmatprep.subr.mxu0 0.0
  %76 = vmatpush2.xpose.msra.mxu0 0.0
  %77 = vmatprep.subr.mxu0 0.0
  %78 = vmatpush2.xpose.msra.mxu0 0.0
  %79 = vmatprep.subr.mxu0 0.0
  %80 = vmatpush2.xpose.msra.mxu0 0.0
  %81 = vmatprep.subr.mxu0 0.0
  %82 = vmatpush2.xpose.msra.mxu0 0.0
  %83 = vmatprep.subr.mxu0 0.0
  %84 = vmatpush2.xpose.msra.mxu0 0.0
  %85 = vmatprep.subr.mxu0 0.0
  %86 = vmatpush2.xpose.msra.mxu0 0.0
  %87 = vmatprep.subr.mxu0 0.0
  %88 = vmatpush2.xpose.msra.mxu0 0.0
  %89 = vmatprep.subr.mxu0 0.0
  %90 = vmatpush2.xpose.msra.mxu0 0.0
  %91 = vmatprep.subr.mxu0 0.0
  %92 = vmatpush2.xpose.msra.mxu0 0.0
  %93 = vmatprep.subr.mxu0 0.0
  %94 = vmatpush2.xpose.msra.mxu0 0.0
  %95 = vmatprep.subr.mxu0 0.0
  %96 = vmatpush2.xpose.msra.mxu0 0.0
  %97 = vmatprep.subr.mxu0 0.0
  %98 = vmatpush2.xpose.msra.mxu0 0.0
  %99 = vmatprep.subr.mxu0 0.0
  %100 = vmatpush2.xpose.msra.mxu0 0.0
  %101 = vmatprep.subr.mxu0 0.0
  %102 = vmatpush2.xpose.msra.mxu0 0.0
  %103 = vmatprep.mubr.f32.mxu0 0.0
  %104 = vmatmul.mubr.f32.gmra.mxu0 %v14
  %v105 = vpop.f32.mrf.mxu0
  %v106 = vadd.f32 %v37, %v105
  %v107 = vpop.f32.mrf.mxu0
  %108 = vmatprep.mubr.f32.mxu0 0.0
  %109 = vmatmul.mubr.f32.gmra.mxu0 %v15
  %v110 = vpop.f32.mrf.mxu0
  %v111 = vadd.f32 %v37, %v110
  %v112 = vpop.f32.mrf.mxu0
  %113 = vdwg.mxu0
  %114 = vst [vmem:[%s3] sm:$0xff] %v106
  %115 = vst [vmem:[%s3 + $0x8] sm:$0xff] %v111
  // Predicated region
  $region14: #{attention_forward.4} parent=0 // pred_check
    _
  $region15: #{attention_forward.4} parent=0 // pred_check_branch
    %117 = sbr.rel (0) target = $region17
  $region16: #{attention_forward.4} parent=0 // pred_region
    _
  $region17: #{attention_forward.4} parent=0 // pred_fallthru
    _
  // Predicated region
  $region18: #{attention_forward.4} parent=0 // pred_check
    _
  $region19: #{attention_forward.4} parent=0 // pred_check_branch
    %119 = sbr.rel (0) target = $region21
  $region20: #{attention_forward.4} parent=0 // pred_region
    _
  $region21: #{attention_forward.4} parent=0 // pred_fallthru
    _

</llo_original>
